<compile_context>
chip_gen: v6e
topology: v6e:2x2x1
jax: 0.10.0
libtpu: 0.0.40
codegen_flags: <defaults>
</compile_context>

<pallas_src>
import functools

import jax
import jax.numpy as jnp
from jax.experimental import pallas as pl
from jax.experimental.pallas import tpu as pltpu


def choose(n: int, k: int) -> int:
    if 0 <= k <= n:
        ntok, ktok = 1, 1
        for t in range(1, min(k, n - k) + 1):
            ntok *= n
            ktok *= t
            n -= 1
        return ntok // ktok
    return 0


def _round_up(x: int, m: int) -> int:
    return ((x + m - 1) // m) * m


# ----------------------------------------------------------------------------
# Fused DLRM kernel: DenseArch MLP -> Interaction (triu packed) -> OverArch MLP
# ----------------------------------------------------------------------------
def _dlrm_fused_kernel(*refs, n_dense, n_over, d_emb, n_sparse, over_in_pad):
    x_ref, sp_ref = refs[0], refs[1]
    p_refs = refs[2:2 + 2 * (n_dense + n_over)]
    o_ref = refs[-1]

    # ---- DenseArch MLP (ReLU every layer); bf16 MXU inputs, f32 accumulate --
    act = x_ref[...]                                     # (TB, IN_P) f32
    k = 0
    for _ in range(n_dense):
        w = p_refs[k][...]                               # (K_P, N_P) bf16
        b = p_refs[k + 1][...]                           # (1, N_P)   f32
        k += 2
        act = jnp.dot(act.astype(w.dtype), w,
                      preferred_element_type=jnp.float32) + b
        act = jnp.maximum(act, 0.0)
    # act: (TB, D_P); columns >= d_emb are exactly 0 (zero weight/bias padding).

    # ---- InteractionArch: pairwise dots of [dense_emb; sparse feats] --------
    tb = act.shape[0]
    dense_emb = act[:, :d_emb]                           # (TB, D) f32
    sp = sp_ref[...]                                     # (TB, SP_P) f32
    feats = [dense_emb] + [sp[:, f * d_emb:(f + 1) * d_emb]
                           for f in range(n_sparse)]

    if act.shape[1] == over_in_pad:
        over = act                    # dense_emb already occupies cols [0, D)
    else:
        over = jnp.concatenate(
            [act, jnp.zeros((tb, over_in_pad - act.shape[1]), jnp.float32)],
            axis=-1)

    lane = jax.lax.broadcasted_iota(jnp.int32, (tb, over_in_pad), 1)
    p = 0
    for i in range(n_sparse + 1):          # torch.triu_indices(offset=1) order
        for j in range(i + 1, n_sparse + 1):
            dp = jnp.sum(feats[i] * feats[j], axis=-1, keepdims=True)  # (TB,1)
            over = over + jnp.where(lane == (d_emb + p), dp, 0.0)
            p += 1

    # ---- OverArch MLP (ReLU on all but the final layer) ---------------------
    act = over
    for li in range(n_over):
        w = p_refs[k][...]
        b = p_refs[k + 1][...]
        k += 2
        act = jnp.dot(act.astype(w.dtype), w,
                      preferred_element_type=jnp.float32) + b
        if li < n_over - 1:
            act = jnp.maximum(act, 0.0)

    o_ref[...] = act.astype(o_ref.dtype)                 # lane-dense (TB, OUT_P)


def dlrm_fused_call(x_p, sp_p, dense_params, over_params, *,
                    block_b, d_emb, n_sparse):
    bp, in_p = x_p.shape
    sp_w = sp_p.shape[1]
    over_in_pad = over_params[0][0].shape[0]
    out_pad = over_params[-1][0].shape[1]

    flat_params = []
    in_specs = [
        pl.BlockSpec((block_b, in_p), lambda i: (i, 0)),
        pl.BlockSpec((block_b, sp_w), lambda i: (i, 0)),
    ]
    for w, b in list(dense_params) + list(over_params):
        flat_params += [w, b]
        in_specs.append(pl.BlockSpec(w.shape, lambda i: (0, 0)))   # resident
        in_specs.append(pl.BlockSpec(b.shape, lambda i: (0, 0)))   # resident

    kern = functools.partial(
        _dlrm_fused_kernel,
        n_dense=len(dense_params), n_over=len(over_params),
        d_emb=d_emb, n_sparse=n_sparse, over_in_pad=over_in_pad)

    return pl.pallas_call(
        kern,
        out_shape=jax.ShapeDtypeStruct((bp, out_pad), jnp.float32),
        grid=(bp // block_b,),
        in_specs=in_specs,
        out_specs=pl.BlockSpec((block_b, out_pad), lambda i: (i, 0)),
        compiler_params=pltpu.CompilerParams(
            dimension_semantics=("parallel",)),
    )(x_p, sp_p, *flat_params)


# ----------------------------------------------------------------------------
# SparseArch (glue) + forward
# ----------------------------------------------------------------------------
def sparse_arch(tables, indices):
    """EmbeddingBagCollection stand-in: sum-pooled fixed-length bags -> (B,F,D)."""
    # TODO(synk): production jagged KJT pooling should be a Pallas
    # PrefetchScalarGridSpec + manual-DMA gather over HBM-resident tables;
    # kept here as a single fused XLA gather (tables fit on-chip at demo size).
    F, E, D = tables.shape
    flat = tables.reshape(F * E, D)
    off = (jnp.arange(F, dtype=indices.dtype) * E)[None, :, None]
    emb = jnp.take(flat, indices + off, axis=0)          # (B, F, L, D)
    return jnp.sum(emb, axis=2)                          # (B, F, D)


def dlrm_forward(params, dense_features, sparse_indices, *, block_b=None):
    dense_params = params["dense_arch"]
    over_params = params["over_arch"]
    tables = params["emb_tables"]
    n_logits = params["num_logits"]

    B, n_dense_in = dense_features.shape
    F, _, D = tables.shape

    if block_b is None:
        # 256-row tiles (v6e MXU sweet spot, fits v7x VMEM); tiny batches
        # collapse to a single sublane-aligned tile.
        block_b = min(256, _round_up(B, 8))
    bp = _round_up(B, block_b)

    in_p = dense_params[0][0].shape[0]
    x_p = jnp.zeros((bp, in_p), jnp.float32).at[:B, :n_dense_in].set(
        dense_features.astype(jnp.float32))

    pooled = sparse_arch(tables, sparse_indices)         # (B, F, D)
    sp_w = _round_up(F * D, 128)
    sp_p = jnp.zeros((bp, sp_w), jnp.float32).at[:B, :F * D].set(
        pooled.reshape(B, F * D))

    out = dlrm_fused_call(x_p, sp_p, dense_params, over_params,
                          block_b=block_b, d_emb=D, n_sparse=F)
    return out[:B, :n_logits]


# ----------------------------------------------------------------------------
# Deterministic parameter init (PyTorch nn.Linear style uniform) + padding
# ----------------------------------------------------------------------------
def init_linear(key, fan_in, fan_out):
    kw, kb = jax.random.split(key)
    bound = 1.0 / (fan_in ** 0.5)
    w = jax.random.uniform(kw, (fan_in, fan_out), jnp.float32, -bound, bound)
    b = jax.random.uniform(kb, (fan_out,), jnp.float32, -bound, bound)
    return w, b


def init_mlp(key, in_features, layer_sizes):
    layers = []
    sizes = [in_features] + list(layer_sizes)
    keys = jax.random.split(key, len(layer_sizes))
    for i in range(len(layer_sizes)):
        layers.append(init_linear(keys[i], sizes[i], sizes[i + 1]))
    return layers


def pad_linear_params(layers, weight_dtype=jnp.bfloat16):
    """Zero-pad (w, b) to 128 multiples; weights -> bf16 (MXU), bias stays f32.

    Zero padding guarantees padded output columns are exactly 0, so slicing
    the valid columns downstream is bit-exact.
    """
    out = []
    for w, b in layers:
        kin, kout = w.shape
        kp, npad = _round_up(kin, 128), _round_up(kout, 128)
        wp = jnp.zeros((kp, npad), weight_dtype).at[:kin, :kout].set(
            w.astype(weight_dtype))
        bp = jnp.zeros((1, npad), jnp.float32).at[0, :kout].set(b)
        out.append((wp, bp))
    return out


if __name__ == "__main__":
    # Small DLRM config
    B = 8                  # batch
    dense_in = 16          # dense input features
    D = 8                  # embedding dim (== dense_arch_layer_sizes[-1])
    F = 4                  # number of sparse features
    L = 3                  # bag length (fixed-length stand-in for KJT)
    num_embeddings = 64
    dense_arch_layer_sizes = [32, D]
    over_arch_layer_sizes = [16, 1]
    over_in = D + choose(F, 2) + F  # 8 + 6 + 4 = 18

    root = jax.random.PRNGKey(0)
    k_dense, k_over, k_emb, k_x, k_idx = jax.random.split(root, 5)

    dense_layers = init_mlp(k_dense, dense_in, dense_arch_layer_sizes)
    over_layers = init_mlp(k_over, over_in, over_arch_layer_sizes)

    params = {
        "dense_arch": pad_linear_params(dense_layers),
        "over_arch": pad_linear_params(over_layers),
        "emb_tables": jax.random.normal(
            k_emb, (F, num_embeddings, D), jnp.float32) * 0.05,
        "num_logits": over_arch_layer_sizes[-1],
    }

    dense_features = jax.random.uniform(k_x, (B, dense_in), jnp.float32)
    sparse_indices = jax.random.randint(
        k_idx, (B, F, L), 0, num_embeddings, jnp.int32)

    logits = dlrm_forward(params, dense_features, sparse_indices)
    logits = jax.block_until_ready(logits)

    assert logits.shape == (B, over_arch_layer_sizes[-1]), logits.shape
    assert bool(jnp.all(jnp.isfinite(logits)))
    print("KERNEL_OK")
</pallas_src>

<mosaic_0001>
module attributes {stable_mosaic.version = 11 : i64} {
  func.func @_dlrm_fused_kernel(%arg0: i32, %arg1: memref<8x128xf32, #tpu.memory_space<vmem>>, %arg2: memref<8x128xf32, #tpu.memory_space<vmem>>, %arg3: memref<128x128xbf16, #tpu.memory_space<vmem>>, %arg4: memref<1x128xf32, #tpu.memory_space<vmem>>, %arg5: memref<128x128xbf16, #tpu.memory_space<vmem>>, %arg6: memref<1x128xf32, #tpu.memory_space<vmem>>, %arg7: memref<128x128xbf16, #tpu.memory_space<vmem>>, %arg8: memref<1x128xf32, #tpu.memory_space<vmem>>, %arg9: memref<128x128xbf16, #tpu.memory_space<vmem>>, %arg10: memref<1x128xf32, #tpu.memory_space<vmem>>, %arg11: memref<8x128xf32, #tpu.memory_space<vmem>>) attributes {dimension_semantics = [#tpu.dimension_semantics<parallel>], iteration_bounds = array<i64: 1>, scalar_prefetch = 0 : i64, scratch_operands = 0 : i64, tpu.core_type = #tpu.core_type<tc>, window_params = [{transform_indices = @transform_0, window_bounds = array<i64: 8, 128>}, {transform_indices = @transform_1, window_bounds = array<i64: 8, 128>}, {pipeline_mode = #tpu.pipeline_mode<synchronous>, transform_indices = @transform_2, window_bounds = array<i64: 128, 128>}, {pipeline_mode = #tpu.pipeline_mode<synchronous>, transform_indices = @transform_3, window_bounds = array<i64: 1, 128>}, {pipeline_mode = #tpu.pipeline_mode<synchronous>, transform_indices = @transform_4, window_bounds = array<i64: 128, 128>}, {pipeline_mode = #tpu.pipeline_mode<synchronous>, transform_indices = @transform_5, window_bounds = array<i64: 1, 128>}, {pipeline_mode = #tpu.pipeline_mode<synchronous>, transform_indices = @transform_6, window_bounds = array<i64: 128, 128>}, {pipeline_mode = #tpu.pipeline_mode<synchronous>, transform_indices = @transform_7, window_bounds = array<i64: 1, 128>}, {pipeline_mode = #tpu.pipeline_mode<synchronous>, transform_indices = @transform_8, window_bounds = array<i64: 128, 128>}, {pipeline_mode = #tpu.pipeline_mode<synchronous>, transform_indices = @transform_9, window_bounds = array<i64: 1, 128>}, {transform_indices = @transform_10, window_bounds = array<i64: 8, 128>}]} {
    %c0 = arith.constant 0 : index
    %c0_0 = arith.constant 0 : index
    %0 = vector.load %arg1[%c0, %c0_0] : memref<8x128xf32, #tpu.memory_space<vmem>>, vector<8x128xf32>
    %c0_1 = arith.constant 0 : index
    %c0_2 = arith.constant 0 : index
    %1 = vector.load %arg3[%c0_1, %c0_2] : memref<128x128xbf16, #tpu.memory_space<vmem>>, vector<128x128xbf16>
    %c0_3 = arith.constant 0 : index
    %c0_4 = arith.constant 0 : index
    %2 = vector.load %arg4[%c0_3, %c0_4] : memref<1x128xf32, #tpu.memory_space<vmem>>, vector<1x128xf32>
    %3 = arith.truncf %0 : vector<8x128xf32> to vector<8x128xbf16>
    %cst = arith.constant dense<0.000000e+00> : vector<8x128xf32>
    %4 = tpu.matmul %3, %1, %cst {dimension_numbers = #tpu.dot_dimension_numbers<[1], [0], [0], [1], [0, 0, 1, 1], [], []>} : vector<8x128xbf16>, vector<128x128xbf16>, vector<8x128xf32> -> vector<8x128xf32>
    %5 = vector.broadcast %2 : vector<1x128xf32> to vector<8x128xf32>
    %6 = arith.addf %4, %5 : vector<8x128xf32>
    %cst_5 = arith.constant 0.000000e+00 : f32
    %7 = vector.broadcast %cst_5 : f32 to vector<8x128xf32>
    %8 = arith.maximumf %6, %7 : vector<8x128xf32>
    %c0_6 = arith.constant 0 : index
    %c0_7 = arith.constant 0 : index
    %9 = vector.load %arg5[%c0_6, %c0_7] : memref<128x128xbf16, #tpu.memory_space<vmem>>, vector<128x128xbf16>
    %c0_8 = arith.constant 0 : index
    %c0_9 = arith.constant 0 : index
    %10 = vector.load %arg6[%c0_8, %c0_9] : memref<1x128xf32, #tpu.memory_space<vmem>>, vector<1x128xf32>
    %11 = arith.truncf %8 : vector<8x128xf32> to vector<8x128xbf16>
    %cst_10 = arith.constant dense<0.000000e+00> : vector<8x128xf32>
    %12 = tpu.matmul %11, %9, %cst_10 {dimension_numbers = #tpu.dot_dimension_numbers<[1], [0], [0], [1], [0, 0, 1, 1], [], []>} : vector<8x128xbf16>, vector<128x128xbf16>, vector<8x128xf32> -> vector<8x128xf32>
    %13 = vector.broadcast %10 : vector<1x128xf32> to vector<8x128xf32>
    %14 = arith.addf %12, %13 : vector<8x128xf32>
    %cst_11 = arith.constant 0.000000e+00 : f32
    %15 = vector.broadcast %cst_11 : f32 to vector<8x128xf32>
    %16 = arith.maximumf %14, %15 : vector<8x128xf32>
    %17 = vector.extract_strided_slice %16 {offsets = [0, 0], sizes = [8, 8], strides = [1, 1]} : vector<8x128xf32> to vector<8x8xf32>
    %c0_12 = arith.constant 0 : index
    %c0_13 = arith.constant 0 : index
    %18 = vector.load %arg2[%c0_12, %c0_13] : memref<8x128xf32, #tpu.memory_space<vmem>>, vector<8x128xf32>
    %19 = vector.extract_strided_slice %18 {offsets = [0, 0], sizes = [8, 8], strides = [1, 1]} : vector<8x128xf32> to vector<8x8xf32>
    %20 = vector.extract_strided_slice %18 {offsets = [0, 8], sizes = [8, 8], strides = [1, 1]} : vector<8x128xf32> to vector<8x8xf32>
    %21 = vector.extract_strided_slice %18 {offsets = [0, 16], sizes = [8, 8], strides = [1, 1]} : vector<8x128xf32> to vector<8x8xf32>
    %22 = vector.extract_strided_slice %18 {offsets = [0, 24], sizes = [8, 8], strides = [1, 1]} : vector<8x128xf32> to vector<8x8xf32>
    %23 = tpu.iota {dimensions = array<i32: 1>} : vector<8x128xi32>
    %24 = arith.mulf %17, %19 : vector<8x8xf32>
    %cst_14 = arith.constant dense<0.000000e+00> : vector<8xf32>
    %25 = vector.multi_reduction <add>, %24, %cst_14 [1] : vector<8x8xf32> to vector<8xf32>
    %26 = vector.shape_cast %25 : vector<8xf32> to vector<8x1xf32>
    %c8_i32 = arith.constant 8 : i32
    %27 = vector.broadcast %c8_i32 : i32 to vector<8x128xi32>
    %28 = arith.cmpi eq, %23, %27 : vector<8x128xi32>
    %cst_15 = arith.constant 0.000000e+00 : f32
    %29 = vector.shape_cast %26 : vector<8x1xf32> to vector<8x1xf32>
    %30 = vector.broadcast %29 : vector<8x1xf32> to vector<8x128xf32>
    %31 = vector.broadcast %cst_15 : f32 to vector<8x128xf32>
    %32 = arith.select %28, %30, %31 : vector<8x128xi1>, vector<8x128xf32>
    %33 = arith.addf %16, %32 : vector<8x128xf32>
    %34 = arith.mulf %17, %20 : vector<8x8xf32>
    %cst_16 = arith.constant dense<0.000000e+00> : vector<8xf32>
    %35 = vector.multi_reduction <add>, %34, %cst_16 [1] : vector<8x8xf32> to vector<8xf32>
    %36 = vector.shape_cast %35 : vector<8xf32> to vector<8x1xf32>
    %c9_i32 = arith.constant 9 : i32
    %37 = vector.broadcast %c9_i32 : i32 to vector<8x128xi32>
    %38 = arith.cmpi eq, %23, %37 : vector<8x128xi32>
    %cst_17 = arith.constant 0.000000e+00 : f32
    %39 = vector.shape_cast %36 : vector<8x1xf32> to vector<8x1xf32>
    %40 = vector.broadcast %39 : vector<8x1xf32> to vector<8x128xf32>
    %41 = vector.broadcast %cst_17 : f32 to vector<8x128xf32>
    %42 = arith.select %38, %40, %41 : vector<8x128xi1>, vector<8x128xf32>
    %43 = arith.addf %33, %42 : vector<8x128xf32>
    %44 = arith.mulf %17, %21 : vector<8x8xf32>
    %cst_18 = arith.constant dense<0.000000e+00> : vector<8xf32>
    %45 = vector.multi_reduction <add>, %44, %cst_18 [1] : vector<8x8xf32> to vector<8xf32>
    %46 = vector.shape_cast %45 : vector<8xf32> to vector<8x1xf32>
    %c10_i32 = arith.constant 10 : i32
    %47 = vector.broadcast %c10_i32 : i32 to vector<8x128xi32>
    %48 = arith.cmpi eq, %23, %47 : vector<8x128xi32>
    %cst_19 = arith.constant 0.000000e+00 : f32
    %49 = vector.shape_cast %46 : vector<8x1xf32> to vector<8x1xf32>
    %50 = vector.broadcast %49 : vector<8x1xf32> to vector<8x128xf32>
    %51 = vector.broadcast %cst_19 : f32 to vector<8x128xf32>
    %52 = arith.select %48, %50, %51 : vector<8x128xi1>, vector<8x128xf32>
    %53 = arith.addf %43, %52 : vector<8x128xf32>
    %54 = arith.mulf %17, %22 : vector<8x8xf32>
    %cst_20 = arith.constant dense<0.000000e+00> : vector<8xf32>
    %55 = vector.multi_reduction <add>, %54, %cst_20 [1] : vector<8x8xf32> to vector<8xf32>
    %56 = vector.shape_cast %55 : vector<8xf32> to vector<8x1xf32>
    %c11_i32 = arith.constant 11 : i32
    %57 = vector.broadcast %c11_i32 : i32 to vector<8x128xi32>
    %58 = arith.cmpi eq, %23, %57 : vector<8x128xi32>
    %cst_21 = arith.constant 0.000000e+00 : f32
    %59 = vector.shape_cast %56 : vector<8x1xf32> to vector<8x1xf32>
    %60 = vector.broadcast %59 : vector<8x1xf32> to vector<8x128xf32>
    %61 = vector.broadcast %cst_21 : f32 to vector<8x128xf32>
    %62 = arith.select %58, %60, %61 : vector<8x128xi1>, vector<8x128xf32>
    %63 = arith.addf %53, %62 : vector<8x128xf32>
    %64 = arith.mulf %19, %20 : vector<8x8xf32>
    %cst_22 = arith.constant dense<0.000000e+00> : vector<8xf32>
    %65 = vector.multi_reduction <add>, %64, %cst_22 [1] : vector<8x8xf32> to vector<8xf32>
    %66 = vector.shape_cast %65 : vector<8xf32> to vector<8x1xf32>
    %c12_i32 = arith.constant 12 : i32
    %67 = vector.broadcast %c12_i32 : i32 to vector<8x128xi32>
    %68 = arith.cmpi eq, %23, %67 : vector<8x128xi32>
    %cst_23 = arith.constant 0.000000e+00 : f32
    %69 = vector.shape_cast %66 : vector<8x1xf32> to vector<8x1xf32>
    %70 = vector.broadcast %69 : vector<8x1xf32> to vector<8x128xf32>
    %71 = vector.broadcast %cst_23 : f32 to vector<8x128xf32>
    %72 = arith.select %68, %70, %71 : vector<8x128xi1>, vector<8x128xf32>
    %73 = arith.addf %63, %72 : vector<8x128xf32>
    %74 = arith.mulf %19, %21 : vector<8x8xf32>
    %cst_24 = arith.constant dense<0.000000e+00> : vector<8xf32>
    %75 = vector.multi_reduction <add>, %74, %cst_24 [1] : vector<8x8xf32> to vector<8xf32>
    %76 = vector.shape_cast %75 : vector<8xf32> to vector<8x1xf32>
    %c13_i32 = arith.constant 13 : i32
    %77 = vector.broadcast %c13_i32 : i32 to vector<8x128xi32>
    %78 = arith.cmpi eq, %23, %77 : vector<8x128xi32>
    %cst_25 = arith.constant 0.000000e+00 : f32
    %79 = vector.shape_cast %76 : vector<8x1xf32> to vector<8x1xf32>
    %80 = vector.broadcast %79 : vector<8x1xf32> to vector<8x128xf32>
    %81 = vector.broadcast %cst_25 : f32 to vector<8x128xf32>
    %82 = arith.select %78, %80, %81 : vector<8x128xi1>, vector<8x128xf32>
    %83 = arith.addf %73, %82 : vector<8x128xf32>
    %84 = arith.mulf %19, %22 : vector<8x8xf32>
    %cst_26 = arith.constant dense<0.000000e+00> : vector<8xf32>
    %85 = vector.multi_reduction <add>, %84, %cst_26 [1] : vector<8x8xf32> to vector<8xf32>
    %86 = vector.shape_cast %85 : vector<8xf32> to vector<8x1xf32>
    %c14_i32 = arith.constant 14 : i32
    %87 = vector.broadcast %c14_i32 : i32 to vector<8x128xi32>
    %88 = arith.cmpi eq, %23, %87 : vector<8x128xi32>
    %cst_27 = arith.constant 0.000000e+00 : f32
    %89 = vector.shape_cast %86 : vector<8x1xf32> to vector<8x1xf32>
    %90 = vector.broadcast %89 : vector<8x1xf32> to vector<8x128xf32>
    %91 = vector.broadcast %cst_27 : f32 to vector<8x128xf32>
    %92 = arith.select %88, %90, %91 : vector<8x128xi1>, vector<8x128xf32>
    %93 = arith.addf %83, %92 : vector<8x128xf32>
    %94 = arith.mulf %20, %21 : vector<8x8xf32>
    %cst_28 = arith.constant dense<0.000000e+00> : vector<8xf32>
    %95 = vector.multi_reduction <add>, %94, %cst_28 [1] : vector<8x8xf32> to vector<8xf32>
    %96 = vector.shape_cast %95 : vector<8xf32> to vector<8x1xf32>
    %c15_i32 = arith.constant 15 : i32
    %97 = vector.broadcast %c15_i32 : i32 to vector<8x128xi32>
    %98 = arith.cmpi eq, %23, %97 : vector<8x128xi32>
    %cst_29 = arith.constant 0.000000e+00 : f32
    %99 = vector.shape_cast %96 : vector<8x1xf32> to vector<8x1xf32>
    %100 = vector.broadcast %99 : vector<8x1xf32> to vector<8x128xf32>
    %101 = vector.broadcast %cst_29 : f32 to vector<8x128xf32>
    %102 = arith.select %98, %100, %101 : vector<8x128xi1>, vector<8x128xf32>
    %103 = arith.addf %93, %102 : vector<8x128xf32>
    %104 = arith.mulf %20, %22 : vector<8x8xf32>
    %cst_30 = arith.constant dense<0.000000e+00> : vector<8xf32>
    %105 = vector.multi_reduction <add>, %104, %cst_30 [1] : vector<8x8xf32> to vector<8xf32>
    %106 = vector.shape_cast %105 : vector<8xf32> to vector<8x1xf32>
    %c16_i32 = arith.constant 16 : i32
    %107 = vector.broadcast %c16_i32 : i32 to vector<8x128xi32>
    %108 = arith.cmpi eq, %23, %107 : vector<8x128xi32>
    %cst_31 = arith.constant 0.000000e+00 : f32
    %109 = vector.shape_cast %106 : vector<8x1xf32> to vector<8x1xf32>
    %110 = vector.broadcast %109 : vector<8x1xf32> to vector<8x128xf32>
    %111 = vector.broadcast %cst_31 : f32 to vector<8x128xf32>
    %112 = arith.select %108, %110, %111 : vector<8x128xi1>, vector<8x128xf32>
    %113 = arith.addf %103, %112 : vector<8x128xf32>
    %114 = arith.mulf %21, %22 : vector<8x8xf32>
    %cst_32 = arith.constant dense<0.000000e+00> : vector<8xf32>
    %115 = vector.multi_reduction <add>, %114, %cst_32 [1] : vector<8x8xf32> to vector<8xf32>
    %116 = vector.shape_cast %115 : vector<8xf32> to vector<8x1xf32>
    %c17_i32 = arith.constant 17 : i32
    %117 = vector.broadcast %c17_i32 : i32 to vector<8x128xi32>
    %118 = arith.cmpi eq, %23, %117 : vector<8x128xi32>
    %cst_33 = arith.constant 0.000000e+00 : f32
    %119 = vector.shape_cast %116 : vector<8x1xf32> to vector<8x1xf32>
    %120 = vector.broadcast %119 : vector<8x1xf32> to vector<8x128xf32>
    %121 = vector.broadcast %cst_33 : f32 to vector<8x128xf32>
    %122 = arith.select %118, %120, %121 : vector<8x128xi1>, vector<8x128xf32>
    %123 = arith.addf %113, %122 : vector<8x128xf32>
    %c0_34 = arith.constant 0 : index
    %c0_35 = arith.constant 0 : index
    %124 = vector.load %arg7[%c0_34, %c0_35] : memref<128x128xbf16, #tpu.memory_space<vmem>>, vector<128x128xbf16>
    %c0_36 = arith.constant 0 : index
    %c0_37 = arith.constant 0 : index
    %125 = vector.load %arg8[%c0_36, %c0_37] : memref<1x128xf32, #tpu.memory_space<vmem>>, vector<1x128xf32>
    %126 = arith.truncf %123 : vector<8x128xf32> to vector<8x128xbf16>
    %cst_38 = arith.constant dense<0.000000e+00> : vector<8x128xf32>
    %127 = tpu.matmul %126, %124, %cst_38 {dimension_numbers = #tpu.dot_dimension_numbers<[1], [0], [0], [1], [0, 0, 1, 1], [], []>} : vector<8x128xbf16>, vector<128x128xbf16>, vector<8x128xf32> -> vector<8x128xf32>
    %128 = vector.broadcast %125 : vector<1x128xf32> to vector<8x128xf32>
    %129 = arith.addf %127, %128 : vector<8x128xf32>
    %cst_39 = arith.constant 0.000000e+00 : f32
    %130 = vector.broadcast %cst_39 : f32 to vector<8x128xf32>
    %131 = arith.maximumf %129, %130 : vector<8x128xf32>
    %c0_40 = arith.constant 0 : index
    %c0_41 = arith.constant 0 : index
    %132 = vector.load %arg9[%c0_40, %c0_41] : memref<128x128xbf16, #tpu.memory_space<vmem>>, vector<128x128xbf16>
    %c0_42 = arith.constant 0 : index
    %c0_43 = arith.constant 0 : index
    %133 = vector.load %arg10[%c0_42, %c0_43] : memref<1x128xf32, #tpu.memory_space<vmem>>, vector<1x128xf32>
    %134 = arith.truncf %131 : vector<8x128xf32> to vector<8x128xbf16>
    %cst_44 = arith.constant dense<0.000000e+00> : vector<8x128xf32>
    %135 = tpu.matmul %134, %132, %cst_44 {dimension_numbers = #tpu.dot_dimension_numbers<[1], [0], [0], [1], [0, 0, 1, 1], [], []>} : vector<8x128xbf16>, vector<128x128xbf16>, vector<8x128xf32> -> vector<8x128xf32>
    %136 = vector.broadcast %133 : vector<1x128xf32> to vector<8x128xf32>
    %137 = arith.addf %135, %136 : vector<8x128xf32>
    %c0_45 = arith.constant 0 : index
    %c0_46 = arith.constant 0 : index
    %138 = vector.load %arg11[%c0_45, %c0_46] : memref<8x128xf32, #tpu.memory_space<vmem>>, vector<8x128xf32>
    tpu.vector_store %arg11[%c0_45, %c0_46], %137 {strides = array<i32>} : memref<8x128xf32, #tpu.memory_space<vmem>>, vector<8x128xf32>,
    return
  }
  func.func @transform_0(%arg0: i32) -> (i32, i32) {
    %c0_i32 = arith.constant 0 : i32
    %c0_i32_0 = arith.constant 0 : i32
    return %arg0, %c0_i32 : i32, i32
  }
  func.func @transform_1(%arg0: i32) -> (i32, i32) {
    %c0_i32 = arith.constant 0 : i32
    %c0_i32_0 = arith.constant 0 : i32
    return %arg0, %c0_i32 : i32, i32
  }
  func.func @transform_2(%arg0: i32) -> (i32, i32) {
    %c0_i32 = arith.constant 0 : i32
    %c0_i32_0 = arith.constant 0 : i32
    %c0_i32_1 = arith.constant 0 : i32
    return %c0_i32, %c0_i32_0 : i32, i32
  }
  func.func @transform_3(%arg0: i32) -> (i32, i32) {
    %c0_i32 = arith.constant 0 : i32
    %c0_i32_0 = arith.constant 0 : i32
    %c0_i32_1 = arith.constant 0 : i32
    return %c0_i32, %c0_i32_0 : i32, i32
  }
  func.func @transform_4(%arg0: i32) -> (i32, i32) {
    %c0_i32 = arith.constant 0 : i32
    %c0_i32_0 = arith.constant 0 : i32
    %c0_i32_1 = arith.constant 0 : i32
    return %c0_i32, %c0_i32_0 : i32, i32
  }
  func.func @transform_5(%arg0: i32) -> (i32, i32) {
    %c0_i32 = arith.constant 0 : i32
    %c0_i32_0 = arith.constant 0 : i32
    %c0_i32_1 = arith.constant 0 : i32
    return %c0_i32, %c0_i32_0 : i32, i32
  }
  func.func @transform_6(%arg0: i32) -> (i32, i32) {
    %c0_i32 = arith.constant 0 : i32
    %c0_i32_0 = arith.constant 0 : i32
    %c0_i32_1 = arith.constant 0 : i32
    return %c0_i32, %c0_i32_0 : i32, i32
  }
  func.func @transform_7(%arg0: i32) -> (i32, i32) {
    %c0_i32 = arith.constant 0 : i32
    %c0_i32_0 = arith.constant 0 : i32
    %c0_i32_1 = arith.constant 0 : i32
    return %c0_i32, %c0_i32_0 : i32, i32
  }
  func.func @transform_8(%arg0: i32) -> (i32, i32) {
    %c0_i32 = arith.constant 0 : i32
    %c0_i32_0 = arith.constant 0 : i32
    %c0_i32_1 = arith.constant 0 : i32
    return %c0_i32, %c0_i32_0 : i32, i32
  }
  func.func @transform_9(%arg0: i32) -> (i32, i32) {
    %c0_i32 = arith.constant 0 : i32
    %c0_i32_0 = arith.constant 0 : i32
    %c0_i32_1 = arith.constant 0 : i32
    return %c0_i32, %c0_i32_0 : i32, i32
  }
  func.func @transform_10(%arg0: i32) -> (i32, i32) {
    %c0_i32 = arith.constant 0 : i32
    %c0_i32_0 = arith.constant 0 : i32
    return %arg0, %c0_i32 : i32, i32
  }
}

</mosaic_0001>

<llo_original>
// kernel: tpu_custom_call.1
$region0: #{tpu_custom_call.1}
  #allocation0 [shape = 'u32[]', space=smem, size = 0x4, offset = 0x4, fixed_abs, tag = 'smem constant byte address 0x4 - core index']
  #allocation1 [shape = 'u32[144,128]{1,0:T(1,128)}', space=vmem, size = 0x12000, scoped, tag = 'internal scratch']
  %s0 = inlined_call_operand.hbm [shape: f32[8,128], index: 0, kind: input, shape index: {}]
  %s1 = inlined_call_operand.hbm [shape: f32[8,128], index: 1, kind: input, shape index: {}]
  %s2 = inlined_call_operand.hbm [shape: bf16[128,128], index: 2, kind: input, shape index: {}]
  %s3 = inlined_call_operand.vmem [shape: f32[1,128], index: 3, kind: input, shape index: {}]
  %s4 = inlined_call_operand.hbm [shape: bf16[128,128], index: 4, kind: input, shape index: {}]
  %s5 = inlined_call_operand.vmem [shape: f32[1,128], index: 5, kind: input, shape index: {}]
  %s6 = inlined_call_operand.hbm [shape: bf16[128,128], index: 6, kind: input, shape index: {}]
  %s7 = inlined_call_operand.vmem [shape: f32[1,128], index: 7, kind: input, shape index: {}]
  %s8 = inlined_call_operand.hbm [shape: bf16[128,128], index: 8, kind: input, shape index: {}]
  %s9 = inlined_call_operand.vmem [shape: f32[1,128], index: 9, kind: input, shape index: {}]
  %s10 = inlined_call_operand.hbm [shape: f32[8,128], index: 10, kind: output, shape index: {}]
  %s11 = sld [smem:[#allocation0]]
  $region74: #{tpu_custom_call.1} parent=0
    _
  %s13 = ssub.s32 1, %s11
  %s14 = scalar_select 0, %s13, %s11
  $region1: #{tpu_custom_call.1} parent=0
    #allocation2 [shape = 'u8[4096]{0}', space=vmem, size = 0x1000, scoped, tag = 'input window, operand 0, single buffered']
    #allocation3 [shape = 's32[1]{0}', space=sflag, size = 0x4, scoped, tag = 'scoped memory for tpu_custom_call.1']
    #allocation4 [shape = 's32[1]{0}', space=sflag, size = 0x4, scoped, tag = 'scoped memory for tpu_custom_call.1']
    #allocation5 [shape = 'u8[4096]{0}', space=vmem, size = 0x1000, scoped, tag = 'input window, operand 1, single buffered']
    #allocation6 [shape = 's32[1]{0}', space=sflag, size = 0x4, scoped, tag = 'scoped memory for tpu_custom_call.1']
    #allocation7 [shape = 'u8[32768]{0}', space=vmem, size = 0x8000, scoped, tag = 'input window, operand 2, single buffered']
    #allocation8 [shape = 'u8[32768]{0}', space=vmem, size = 0x8000, scoped, tag = 'input window, operand 4, single buffered']
    #allocation9 [shape = 's32[1]{0}', space=sflag, size = 0x4, scoped, tag = 'scoped memory for tpu_custom_call.1']
    #allocation10 [shape = 'u8[32768]{0}', space=vmem, size = 0x8000, scoped, tag = 'input window, operand 6, single buffered']
    #allocation11 [shape = 'u8[32768]{0}', space=vmem, size = 0x8000, scoped, tag = 'input window, operand 8, single buffered']
    #allocation12 [shape = 's32[1]{0}', space=sflag, size = 0x4, scoped, tag = 'scoped memory for tpu_custom_call.1']
    #allocation13 [shape = 'u8[4096]{0}', space=vmem, size = 0x1000, scoped, tag = 'output window, operand 0, single buffered']
    %15 = vsyncpa [#allocation3], 0
    %16 = vsyncpa [#allocation6], 0
    %17 = vsyncpa [#allocation9], 0
    %18 = vsyncpa [#allocation12], 0
    %19 = vsyncpa [#allocation4], 0
    // Predicated region
    $region2: #{tpu_custom_call.1} parent=1 // pred_check
      _
    $region3: #{tpu_custom_call.1} parent=1 // pred_check_branch
      %21 = sbr.rel (0) target = $region5
    $region4: #{tpu_custom_call.1} parent=1 // pred_region
      %s23 = ssub.s32 128, 128
      %24 = vsyncadd [#allocation3], %s23
      %s26 = sshll.u32 [#allocation2], 4
      %s27 = int_to_ptr.vmem [resolvable:$true] %s26
      %29 = dma.hbm_to_vmem [thread:$0]  %s0, 128, %s27, [#allocation3]
    $region5: #{tpu_custom_call.1} parent=1 // pred_fallthru
      _
    // Predicated region
    $region6: #{tpu_custom_call.1} parent=1 // pred_check
      _
    $region7: #{tpu_custom_call.1} parent=1 // pred_check_branch
      %31 = sbr.rel (0) target = $region9
    $region8: #{tpu_custom_call.1} parent=1 // pred_region
      %s33 = ssub.s32 128, 128
      %34 = vsyncadd [#allocation6], %s33
      %s36 = sshll.u32 [#allocation5], 4
      %s37 = int_to_ptr.vmem [resolvable:$true] %s36
      %39 = dma.hbm_to_vmem [thread:$0]  %s1, 128, %s37, [#allocation6]
    $region9: #{tpu_custom_call.1} parent=1 // pred_fallthru
      _
    // Predicated region
    $region10: #{tpu_custom_call.1} parent=1 // pred_check
      _
    $region11: #{tpu_custom_call.1} parent=1 // pred_check_branch
      %41 = sbr.rel (0) target = $region13
    $region12: #{tpu_custom_call.1} parent=1 // pred_region
      %s43 = ssub.s32 1024, 1024
      %44 = vsyncadd [#allocation6], %s43
      %s45 = sshll.u32 [#allocation7], 4
      %s46 = int_to_ptr.vmem [resolvable:$true] %s45
      %51 = dma.hbm_to_vmem [thread:$0]  %s2, 1024, %s46, [#allocation6], 64, 64, 4
    $region13: #{tpu_custom_call.1} parent=1 // pred_fallthru
      _
    // Predicated region
    $region14: #{tpu_custom_call.1} parent=1 // pred_check
      _
    $region15: #{tpu_custom_call.1} parent=1 // pred_check_branch
      %53 = sbr.rel (0) target = $region17
    $region16: #{tpu_custom_call.1} parent=1 // pred_region
      _
    $region17: #{tpu_custom_call.1} parent=1 // pred_fallthru
      _
    // Predicated region
    $region18: #{tpu_custom_call.1} parent=1 // pred_check
      _
    $region19: #{tpu_custom_call.1} parent=1 // pred_check_branch
      %55 = sbr.rel (0) target = $region21
    $region20: #{tpu_custom_call.1} parent=1 // pred_region
      %s57 = ssub.s32 1024, 1024
      %58 = vsyncadd [#allocation9], %s57
      %s59 = sshll.u32 [#allocation8], 4
      %s60 = int_to_ptr.vmem [resolvable:$true] %s59
      %65 = dma.hbm_to_vmem [thread:$0]  %s4, 1024, %s60, [#allocation9], 64, 64, 4
    $region21: #{tpu_custom_call.1} parent=1 // pred_fallthru
      _
    // Predicated region
    $region22: #{tpu_custom_call.1} parent=1 // pred_check
      _
    $region23: #{tpu_custom_call.1} parent=1 // pred_check_branch
      %67 = sbr.rel (0) target = $region25
    $region24: #{tpu_custom_call.1} parent=1 // pred_region
      _
    $region25: #{tpu_custom_call.1} parent=1 // pred_fallthru
      _
    // Predicated region
    $region26: #{tpu_custom_call.1} parent=1 // pred_check
      _
    $region27: #{tpu_custom_call.1} parent=1 // pred_check_branch
      %69 = sbr.rel (0) target = $region29
    $region28: #{tpu_custom_call.1} parent=1 // pred_region
      %s71 = ssub.s32 1024, 1024
      %72 = vsyncadd [#allocation9], %s71
      %s73 = sshll.u32 [#allocation10], 4
      %s74 = int_to_ptr.vmem [resolvable:$true] %s73
      %79 = dma.hbm_to_vmem [thread:$0]  %s6, 1024, %s74, [#allocation9], 64, 64, 4
    $region29: #{tpu_custom_call.1} parent=1 // pred_fallthru
      _
    // Predicated region
    $region30: #{tpu_custom_call.1} parent=1 // pred_check
      _
    $region31: #{tpu_custom_call.1} parent=1 // pred_check_branch
      %81 = sbr.rel (0) target = $region33
    $region32: #{tpu_custom_call.1} parent=1 // pred_region
      _
    $region33: #{tpu_custom_call.1} parent=1 // pred_fallthru
      _
    // Predicated region
    $region34: #{tpu_custom_call.1} parent=1 // pred_check
      _
    $region35: #{tpu_custom_call.1} parent=1 // pred_check_branch
      %83 = sbr.rel (0) target = $region37
    $region36: #{tpu_custom_call.1} parent=1 // pred_region
      %s85 = ssub.s32 1024, 1024
      %86 = vsyncadd [#allocation12], %s85
      %s87 = sshll.u32 [#allocation11], 4
      %s88 = int_to_ptr.vmem [resolvable:$true] %s87
      %93 = dma.hbm_to_vmem [thread:$0]  %s8, 1024, %s88, [#allocation12], 64, 64, 4
    $region37: #{tpu_custom_call.1} parent=1 // pred_fallthru
      _
    // Predicated region
    $region38: #{tpu_custom_call.1} parent=1 // pred_check
      _
    $region39: #{tpu_custom_call.1} parent=1 // pred_check_branch
      %95 = sbr.rel (0) target = $region41
    $region40: #{tpu_custom_call.1} parent=1 // pred_region
      _
    $region41: #{tpu_custom_call.1} parent=1 // pred_fallthru
      _
    // Predicated region
    $region42: #{tpu_custom_call.1} parent=1 // pred_check
      _
    $region43: #{tpu_custom_call.1} parent=1 // pred_check_branch
      %97 = sbr.rel (0) target = $region45
    $region44: #{tpu_custom_call.1} parent=1 // pred_region
      %98 = dma.done [#allocation3], 128
    $region45: #{tpu_custom_call.1} parent=1 // pred_fallthru
      _
    // Predicated region
    $region46: #{tpu_custom_call.1} parent=1 // pred_check
      _
    $region47: #{tpu_custom_call.1} parent=1 // pred_check_branch
      %100 = sbr.rel (0) target = $region49
    $region48: #{tpu_custom_call.1} parent=1 // pred_region
      %101 = dma.done [#allocation6], 128
    $region49: #{tpu_custom_call.1} parent=1 // pred_fallthru
      _
    // Predicated region
    $region50: #{tpu_custom_call.1} parent=1 // pred_check
      _
    $region51: #{tpu_custom_call.1} parent=1 // pred_check_branch
      %103 = sbr.rel (0) target = $region53
    $region52: #{tpu_custom_call.1} parent=1 // pred_region
      %104 = dma.done [#allocation6], 1024
    $region53: #{tpu_custom_call.1} parent=1 // pred_fallthru
      _
    // Predicated region
    $region54: #{tpu_custom_call.1} parent=1 // pred_check
      _
    $region55: #{tpu_custom_call.1} parent=1 // pred_check_branch
      %106 = sbr.rel (0) target = $region57
    $region56: #{tpu_custom_call.1} parent=1 // pred_region
      %107 = dma.done [#allocation9], 1024
    $region57: #{tpu_custom_call.1} parent=1 // pred_fallthru
      _
    // Predicated region
    $region58: #{tpu_custom_call.1} parent=1 // pred_check
      _
    $region59: #{tpu_custom_call.1} parent=1 // pred_check_branch
      %109 = sbr.rel (0) target = $region61
    $region60: #{tpu_custom_call.1} parent=1 // pred_region
      %110 = dma.done [#allocation9], 1024
    $region61: #{tpu_custom_call.1} parent=1 // pred_fallthru
      _
    // Predicated region
    $region62: #{tpu_custom_call.1} parent=1 // pred_check
      _
    $region63: #{tpu_custom_call.1} parent=1 // pred_check_branch
      %112 = sbr.rel (0) target = $region65
    $region64: #{tpu_custom_call.1} parent=1 // pred_region
      %113 = dma.done [#allocation12], 1024
    $region65: #{tpu_custom_call.1} parent=1 // pred_fallthru
      _
    %v115 = vld [vmem:[#allocation2] sm:$0xff]
    %v116 = vld [vmem:[#allocation7] sm:$0xf]
    %v117 = vld [vmem:[#allocation7 + $0x4] sm:$0xf]
    %v118 = vld [vmem:[#allocation7 + $0x8] sm:$0xf]
    %v119 = vld [vmem:[#allocation7 + $0xc] sm:$0xf]
    %v120 = vld [vmem:[#allocation7 + $0x10] sm:$0xf]
    %v121 = vld [vmem:[#allocation7 + $0x14] sm:$0xf]
    %v122 = vld [vmem:[#allocation7 + $0x18] sm:$0xf]
    %v123 = vld [vmem:[#allocation7 + $0x1c] sm:$0xf]
    %v124 = vld [vmem:[#allocation7 + $0x20] sm:$0xf]
    %v125 = vld [vmem:[#allocation7 + $0x24] sm:$0xf]
    %v126 = vld [vmem:[#allocation7 + $0x28] sm:$0xf]
    %v127 = vld [vmem:[#allocation7 + $0x2c] sm:$0xf]
    %v128 = vld [vmem:[#allocation7 + $0x30] sm:$0xf]
    %v129 = vld [vmem:[#allocation7 + $0x34] sm:$0xf]
    %v130 = vld [vmem:[#allocation7 + $0x38] sm:$0xf]
    %v131 = vld [vmem:[#allocation7 + $0x3c] sm:$0xf]
    %v132 = vld [vmem:[%s3] sm:$0x1]
    %v133 = vpack.c.bf16 %v115, %v115
    %v135 = vlaneseq
    %v136 = vshrl.u32 %v135, 7
    %v137 = vsub.s32 0, %v136
    %v138 = vrot.slane %v132, %v137
    %v156 = vunpack.c.l.b16 %v116
    %v157 = vunpack.c.l.b16 %v117
    %v158 = vunpack.c.l.b16 %v118
    %v159 = vunpack.c.l.b16 %v119
    %v160 = vunpack.c.l.b16 %v120
    %v161 = vunpack.c.l.b16 %v121
    %v162 = vunpack.c.l.b16 %v122
    %v163 = vunpack.c.l.b16 %v123
    %v164 = vunpack.c.l.b16 %v124
    %v165 = vunpack.c.l.b16 %v125
    %v166 = vunpack.c.l.b16 %v126
    %v167 = vunpack.c.l.b16 %v127
    %v168 = vunpack.c.l.b16 %v128
    %v169 = vunpack.c.l.b16 %v129
    %v170 = vunpack.c.l.b16 %v130
    %v171 = vunpack.c.l.b16 %v131
    %v172 = vpack.c.b16 %v157, %v156
    %v173 = vpack.c.b16 %v159, %v158
    %v174 = vpack.c.b16 %v161, %v160
    %v175 = vpack.c.b16 %v163, %v162
    %v176 = vpack.c.b16 %v165, %v164
    %v177 = vpack.c.b16 %v167, %v166
    %v178 = vpack.c.b16 %v169, %v168
    %v179 = vpack.c.b16 %v171, %v170
    %188 = vmatprep.subr.bf16.mxu0 0
    %189 = vmatpush1.bf16.msra.mxu0 %v179
    %190 = vmatprep.subr.bf16.mxu0 0
    %191 = vmatpush1.bf16.msra.mxu0 %v178
    %192 = vmatprep.subr.bf16.mxu0 0
    %193 = vmatpush1.bf16.msra.mxu0 %v177
    %194 = vmatprep.subr.bf16.mxu0 0
    %195 = vmatpush1.bf16.msra.mxu0 %v176
    %196 = vmatprep.subr.bf16.mxu0 0
    %197 = vmatpush1.bf16.msra.mxu0 %v175
    %198 = vmatprep.subr.bf16.mxu0 0
    %199 = vmatpush1.bf16.msra.mxu0 %v174
    %200 = vmatprep.subr.bf16.mxu0 0
    %201 = vmatpush1.bf16.msra.mxu0 %v173
    %202 = vmatprep.subr.bf16.mxu0 0
    %203 = vmatpush1.bf16.msra.mxu0 %v172
    %204 = vmatprep.subr.bf16.mxu0 0
    %205 = vmatpush2.bf16.msra.mxu0 0
    %206 = vmatprep.subr.bf16.mxu0 0
    %207 = vmatpush2.bf16.msra.mxu0 0
    %208 = vmatprep.subr.bf16.mxu0 0
    %209 = vmatpush2.bf16.msra.mxu0 0
    %210 = vmatprep.subr.bf16.mxu0 0
    %211 = vmatpush2.bf16.msra.mxu0 0
    %212 = vmatprep.subr.bf16.mxu0 0
    %213 = vmatpush2.bf16.msra.mxu0 0
    %214 = vmatprep.subr.bf16.mxu0 0
    %215 = vmatpush2.bf16.msra.mxu0 0
    %216 = vmatprep.subr.bf16.mxu0 0
    %217 = vmatpush2.bf16.msra.mxu0 0
    %218 = vmatprep.subr.bf16.mxu0 0
    %219 = vmatpush2.bf16.msra.mxu0 0
    %220 = vmatprep.mubr.bf16.mxu0 0
    %221 = vmatmul.mubr.bf16.gmra.mxu0 %v133
    %v222 = vpop.f32.mrf.mxu0
    %v223 = vadd.f32 %v138, %v222
    %v224 = vpop.f32.mrf.mxu0
    %v225 = vpop.f32.mrf.mxu0
    %v226 = vpop.f32.mrf.mxu0
    %227 = vdwg.mxu0
    %v228 = vmax.f32 %v223, 0.0
    %v229 = vld [vmem:[#allocation8] sm:$0xf]
    %v230 = vld [vmem:[#allocation8 + $0x4] sm:$0xf]
    %v231 = vld [vmem:[#allocation8 + $0x8] sm:$0xf]
    %v232 = vld [vmem:[#allocation8 + $0xc] sm:$0xf]
    %v233 = vld [vmem:[#allocation8 + $0x10] sm:$0xf]
    %v234 = vld [vmem:[#allocation8 + $0x14] sm:$0xf]
    %v235 = vld [vmem:[#allocation8 + $0x18] sm:$0xf]
    %v236 = vld [vmem:[#allocation8 + $0x1c] sm:$0xf]
    %v237 = vld [vmem:[#allocation8 + $0x20] sm:$0xf]
    %v238 = vld [vmem:[#allocation8 + $0x24] sm:$0xf]
    %v239 = vld [vmem:[#allocation8 + $0x28] sm:$0xf]
    %v240 = vld [vmem:[#allocation8 + $0x2c] sm:$0xf]
    %v241 = vld [vmem:[#allocation8 + $0x30] sm:$0xf]
    %v242 = vld [vmem:[#allocation8 + $0x34] sm:$0xf]
    %v243 = vld [vmem:[#allocation8 + $0x38] sm:$0xf]
    %v244 = vld [vmem:[#allocation8 + $0x3c] sm:$0xf]
    %v245 = vld [vmem:[%s5] sm:$0x1]
    %v246 = vpack.c.bf16 %v228, %v228
    %v248 = vlaneseq
    %v249 = vshrl.u32 %v248, 7
    %v250 = vsub.s32 0, %v249
    %v251 = vrot.slane %v245, %v250
    %v269 = vunpack.c.l.b16 %v229
    %v270 = vunpack.c.l.b16 %v230
    %v271 = vunpack.c.l.b16 %v231
    %v272 = vunpack.c.l.b16 %v232
    %v273 = vunpack.c.l.b16 %v233
    %v274 = vunpack.c.l.b16 %v234
    %v275 = vunpack.c.l.b16 %v235
    %v276 = vunpack.c.l.b16 %v236
    %v277 = vunpack.c.l.b16 %v237
    %v278 = vunpack.c.l.b16 %v238
    %v279 = vunpack.c.l.b16 %v239
    %v280 = vunpack.c.l.b16 %v240
    %v281 = vunpack.c.l.b16 %v241
    %v282 = vunpack.c.l.b16 %v242
    %v283 = vunpack.c.l.b16 %v243
    %v284 = vunpack.c.l.b16 %v244
    %v285 = vpack.c.b16 %v270, %v269
    %v286 = vpack.c.b16 %v272, %v271
    %v287 = vpack.c.b16 %v274, %v273
    %v288 = vpack.c.b16 %v276, %v275
    %v289 = vpack.c.b16 %v278, %v277
    %v290 = vpack.c.b16 %v280, %v279
    %v291 = vpack.c.b16 %v282, %v281
    %v292 = vpack.c.b16 %v284, %v283
    %301 = vmatprep.subr.bf16.mxu0 0
    %302 = vmatpush1.bf16.msra.mxu0 %v292
    %303 = vmatprep.subr.bf16.mxu0 0
    %304 = vmatpush1.bf16.msra.mxu0 %v291
    %305 = vmatprep.subr.bf16.mxu0 0
    %306 = vmatpush1.bf16.msra.mxu0 %v290
    %307 = vmatprep.subr.bf16.mxu0 0
    %308 = vmatpush1.bf16.msra.mxu0 %v289
    %309 = vmatprep.subr.bf16.mxu0 0
    %310 = vmatpush1.bf16.msra.mxu0 %v288
    %311 = vmatprep.subr.bf16.mxu0 0
    %312 = vmatpush1.bf16.msra.mxu0 %v287
    %313 = vmatprep.subr.bf16.mxu0 0
    %314 = vmatpush1.bf16.msra.mxu0 %v286
    %315 = vmatprep.subr.bf16.mxu0 0
    %316 = vmatpush1.bf16.msra.mxu0 %v285
    %317 = vmatprep.subr.bf16.mxu0 0
    %318 = vmatpush2.bf16.msra.mxu0 0
    %319 = vmatprep.subr.bf16.mxu0 0
    %320 = vmatpush2.bf16.msra.mxu0 0
    %321 = vmatprep.subr.bf16.mxu0 0
    %322 = vmatpush2.bf16.msra.mxu0 0
    %323 = vmatprep.subr.bf16.mxu0 0
    %324 = vmatpush2.bf16.msra.mxu0 0
    %325 = vmatprep.subr.bf16.mxu0 0
    %326 = vmatpush2.bf16.msra.mxu0 0
    %327 = vmatprep.subr.bf16.mxu0 0
    %328 = vmatpush2.bf16.msra.mxu0 0
    %329 = vmatprep.subr.bf16.mxu0 0
    %330 = vmatpush2.bf16.msra.mxu0 0
    %331 = vmatprep.subr.bf16.mxu0 0
    %332 = vmatpush2.bf16.msra.mxu0 0
    %333 = vmatprep.mubr.bf16.mxu0 0
    %334 = vmatmul.mubr.bf16.gmra.mxu0 %v246
    %v335 = vpop.f32.mrf.mxu0
    %v336 = vadd.f32 %v251, %v335
    %v337 = vpop.f32.mrf.mxu0
    %v338 = vpop.f32.mrf.mxu0
    %v339 = vpop.f32.mrf.mxu0
    %340 = vdwg.mxu0
    %v341 = vmax.f32 %v336, 0.0
    %v342 = vld [vmem:[#allocation5] sm:$0xff]
    %v343 = vlaneseq
    %v344 = vand.u32 %v343, 127
    %v345 = vmul.f32 %v341, %v342
    %vm346 = vcmask 64512
    %v347 = vsel %vm346, %v345, 0.0
    %348 = vadd.xlane.f32.xlu0 %v347
    %v349 = vpop.xlane.xlu0 %348
    %vm350 = vcmp.eq.s32.totalorder %v344, 8
    %v351 = vsel %vm350, %v349, 0.0
    %v352 = vadd.f32 %v341, %v351
    %354 = vrot.lane.b32.xlu0 %v342, 120
    %v355 = vpop.permute.xlu0 %354
    %v357 = vmul.f32 %v341, %v355
    %v358 = vsel %vm346, %v357, 0.0
    %359 = vadd.xlane.f32.xlu0 %v358
    %v360 = vpop.xlane.xlu0 %359
    %vm361 = vcmp.eq.s32.totalorder %v344, 9
    %v362 = vsel %vm361, %v360, 0.0
    %v363 = vadd.f32 %v352, %v362
    %364 = vrot.lane.b32.xlu0 %v342, 112
    %v365 = vpop.permute.xlu0 %364
    %v367 = vmul.f32 %v341, %v365
    %v368 = vsel %vm346, %v367, 0.0
    %369 = vadd.xlane.f32.xlu0 %v368
    %v370 = vpop.xlane.xlu0 %369
    %vm371 = vcmp.eq.s32.totalorder %v344, 10
    %v372 = vsel %vm371, %v370, 0.0
    %v373 = vadd.f32 %v363, %v372
    %374 = vrot.lane.b32.xlu0 %v342, 104
    %v375 = vpop.permute.xlu0 %374
    %v377 = vmul.f32 %v341, %v375
    %v378 = vsel %vm346, %v377, 0.0
    %379 = vadd.xlane.f32.xlu0 %v378
    %v380 = vpop.xlane.xlu0 %379
    %vm381 = vcmp.eq.s32.totalorder %v344, 11
    %v382 = vsel %vm381, %v380, 0.0
    %v383 = vadd.f32 %v373, %v382
    %v384 = vmul.f32 %v342, %v355
    %v385 = vsel %vm346, %v384, 0.0
    %386 = vadd.xlane.f32.xlu0 %v385
    %v387 = vpop.xlane.xlu0 %386
    %vm388 = vcmp.eq.s32.totalorder %v344, 12
    %v389 = vsel %vm388, %v387, 0.0
    %v390 = vadd.f32 %v383, %v389
    %v391 = vmul.f32 %v342, %v365
    %v392 = vsel %vm346, %v391, 0.0
    %393 = vadd.xlane.f32.xlu0 %v392
    %v394 = vpop.xlane.xlu0 %393
    %vm395 = vcmp.eq.s32.totalorder %v344, 13
    %v396 = vsel %vm395, %v394, 0.0
    %v397 = vadd.f32 %v390, %v396
    %v398 = vmul.f32 %v342, %v375
    %v399 = vsel %vm346, %v398, 0.0
    %400 = vadd.xlane.f32.xlu0 %v399
    %v401 = vpop.xlane.xlu0 %400
    %vm402 = vcmp.eq.s32.totalorder %v344, 14
    %v403 = vsel %vm402, %v401, 0.0
    %v404 = vadd.f32 %v397, %v403
    %406 = vrot.lane.b32.xlu0 %v384, 120
    %v407 = vpop.permute.xlu0 %406
    %v409 = vsel %vm346, %v407, 0.0
    %410 = vadd.xlane.f32.xlu0 %v409
    %v411 = vpop.xlane.xlu0 %410
    %vm412 = vcmp.eq.s32.totalorder %v344, 15
    %v413 = vsel %vm412, %v411, 0.0
    %v414 = vadd.f32 %v404, %v413
    %416 = vrot.lane.b32.xlu0 %v391, 120
    %v417 = vpop.permute.xlu0 %416
    %v419 = vsel %vm346, %v417, 0.0
    %420 = vadd.xlane.f32.xlu0 %v419
    %v421 = vpop.xlane.xlu0 %420
    %vm422 = vcmp.eq.s32.totalorder %v344, 16
    %v423 = vsel %vm422, %v421, 0.0
    %v424 = vadd.f32 %v414, %v423
    %425 = vrot.lane.b32.xlu0 %v384, 112
    %v426 = vpop.permute.xlu0 %425
    %v428 = vsel %vm346, %v426, 0.0
    %429 = vadd.xlane.f32.xlu0 %v428
    %v430 = vpop.xlane.xlu0 %429
    %vm431 = vcmp.eq.s32.totalorder %v344, 17
    %v432 = vsel %vm431, %v430, 0.0
    %v433 = vadd.f32 %v424, %v432
    %v434 = vld [vmem:[#allocation10] sm:$0xf]
    %v435 = vld [vmem:[#allocation10 + $0x4] sm:$0xf]
    %v436 = vld [vmem:[#allocation10 + $0x8] sm:$0xf]
    %v437 = vld [vmem:[#allocation10 + $0xc] sm:$0xf]
    %v438 = vld [vmem:[#allocation10 + $0x10] sm:$0xf]
    %v439 = vld [vmem:[#allocation10 + $0x14] sm:$0xf]
    %v440 = vld [vmem:[#allocation10 + $0x18] sm:$0xf]
    %v441 = vld [vmem:[#allocation10 + $0x1c] sm:$0xf]
    %v442 = vld [vmem:[#allocation10 + $0x20] sm:$0xf]
    %v443 = vld [vmem:[#allocation10 + $0x24] sm:$0xf]
    %v444 = vld [vmem:[#allocation10 + $0x28] sm:$0xf]
    %v445 = vld [vmem:[#allocation10 + $0x2c] sm:$0xf]
    %v446 = vld [vmem:[#allocation10 + $0x30] sm:$0xf]
    %v447 = vld [vmem:[#allocation10 + $0x34] sm:$0xf]
    %v448 = vld [vmem:[#allocation10 + $0x38] sm:$0xf]
    %v449 = vld [vmem:[#allocation10 + $0x3c] sm:$0xf]
    %v450 = vld [vmem:[%s7] sm:$0x1]
    %v451 = vpack.c.bf16 %v433, %v433
    %v453 = vlaneseq
    %v454 = vshrl.u32 %v453, 7
    %v455 = vsub.s32 0, %v454
    %v456 = vrot.slane %v450, %v455
    %v474 = vunpack.c.l.b16 %v434
    %v475 = vunpack.c.l.b16 %v435
    %v476 = vunpack.c.l.b16 %v436
    %v477 = vunpack.c.l.b16 %v437
    %v478 = vunpack.c.l.b16 %v438
    %v479 = vunpack.c.l.b16 %v439
    %v480 = vunpack.c.l.b16 %v440
    %v481 = vunpack.c.l.b16 %v441
    %v482 = vunpack.c.l.b16 %v442
    %v483 = vunpack.c.l.b16 %v443
    %v484 = vunpack.c.l.b16 %v444
    %v485 = vunpack.c.l.b16 %v445
    %v486 = vunpack.c.l.b16 %v446
    %v487 = vunpack.c.l.b16 %v447
    %v488 = vunpack.c.l.b16 %v448
    %v489 = vunpack.c.l.b16 %v449
    %v490 = vpack.c.b16 %v475, %v474
    %v491 = vpack.c.b16 %v477, %v476
    %v492 = vpack.c.b16 %v479, %v478
    %v493 = vpack.c.b16 %v481, %v480
    %v494 = vpack.c.b16 %v483, %v482
    %v495 = vpack.c.b16 %v485, %v484
    %v496 = vpack.c.b16 %v487, %v486
    %v497 = vpack.c.b16 %v489, %v488
    %506 = vmatprep.subr.bf16.mxu0 0
    %507 = vmatpush1.bf16.msra.mxu0 %v497
    %508 = vmatprep.subr.bf16.mxu0 0
    %509 = vmatpush1.bf16.msra.mxu0 %v496
    %510 = vmatprep.subr.bf16.mxu0 0
    %511 = vmatpush1.bf16.msra.mxu0 %v495
    %512 = vmatprep.subr.bf16.mxu0 0
    %513 = vmatpush1.bf16.msra.mxu0 %v494
    %514 = vmatprep.subr.bf16.mxu0 0
    %515 = vmatpush1.bf16.msra.mxu0 %v493
    %516 = vmatprep.subr.bf16.mxu0 0
    %517 = vmatpush1.bf16.msra.mxu0 %v492
    %518 = vmatprep.subr.bf16.mxu0 0
    %519 = vmatpush1.bf16.msra.mxu0 %v491
    %520 = vmatprep.subr.bf16.mxu0 0
    %521 = vmatpush1.bf16.msra.mxu0 %v490
    %522 = vmatprep.subr.bf16.mxu0 0
    %523 = vmatpush2.bf16.msra.mxu0 0
    %524 = vmatprep.subr.bf16.mxu0 0
    %525 = vmatpush2.bf16.msra.mxu0 0
    %526 = vmatprep.subr.bf16.mxu0 0
    %527 = vmatpush2.bf16.msra.mxu0 0
    %528 = vmatprep.subr.bf16.mxu0 0
    %529 = vmatpush2.bf16.msra.mxu0 0
    %530 = vmatprep.subr.bf16.mxu0 0
    %531 = vmatpush2.bf16.msra.mxu0 0
    %532 = vmatprep.subr.bf16.mxu0 0
    %533 = vmatpush2.bf16.msra.mxu0 0
    %534 = vmatprep.subr.bf16.mxu0 0
    %535 = vmatpush2.bf16.msra.mxu0 0
    %536 = vmatprep.subr.bf16.mxu0 0
    %537 = vmatpush2.bf16.msra.mxu0 0
    %538 = vmatprep.mubr.bf16.mxu0 0
    %539 = vmatmul.mubr.bf16.gmra.mxu0 %v451
    %v540 = vpop.f32.mrf.mxu0
    %v541 = vadd.f32 %v456, %v540
    %v542 = vpop.f32.mrf.mxu0
    %v543 = vpop.f32.mrf.mxu0
    %v544 = vpop.f32.mrf.mxu0
    %545 = vdwg.mxu0
    %v546 = vmax.f32 %v541, 0.0
    %v547 = vld [vmem:[#allocation11] sm:$0xf]
    %v548 = vld [vmem:[#allocation11 + $0x4] sm:$0xf]
    %v549 = vld [vmem:[#allocation11 + $0x8] sm:$0xf]
    %v550 = vld [vmem:[#allocation11 + $0xc] sm:$0xf]
    %v551 = vld [vmem:[#allocation11 + $0x10] sm:$0xf]
    %v552 = vld [vmem:[#allocation11 + $0x14] sm:$0xf]
    %v553 = vld [vmem:[#allocation11 + $0x18] sm:$0xf]
    %v554 = vld [vmem:[#allocation11 + $0x1c] sm:$0xf]
    %v555 = vld [vmem:[#allocation11 + $0x20] sm:$0xf]
    %v556 = vld [vmem:[#allocation11 + $0x24] sm:$0xf]
    %v557 = vld [vmem:[#allocation11 + $0x28] sm:$0xf]
    %v558 = vld [vmem:[#allocation11 + $0x2c] sm:$0xf]
    %v559 = vld [vmem:[#allocation11 + $0x30] sm:$0xf]
    %v560 = vld [vmem:[#allocation11 + $0x34] sm:$0xf]
    %v561 = vld [vmem:[#allocation11 + $0x38] sm:$0xf]
    %v562 = vld [vmem:[#allocation11 + $0x3c] sm:$0xf]
    %v563 = vld [vmem:[%s9] sm:$0x1]
    %v564 = vpack.c.bf16 %v546, %v546
    %v566 = vlaneseq
    %v567 = vshrl.u32 %v566, 7
    %v568 = vsub.s32 0, %v567
    %v569 = vrot.slane %v563, %v568
    %v587 = vunpack.c.l.b16 %v547
    %v588 = vunpack.c.l.b16 %v548
    %v589 = vunpack.c.l.b16 %v549
    %v590 = vunpack.c.l.b16 %v550
    %v591 = vunpack.c.l.b16 %v551
    %v592 = vunpack.c.l.b16 %v552
    %v593 = vunpack.c.l.b16 %v553
    %v594 = vunpack.c.l.b16 %v554
    %v595 = vunpack.c.l.b16 %v555
    %v596 = vunpack.c.l.b16 %v556
    %v597 = vunpack.c.l.b16 %v557
    %v598 = vunpack.c.l.b16 %v558
    %v599 = vunpack.c.l.b16 %v559
    %v600 = vunpack.c.l.b16 %v560
    %v601 = vunpack.c.l.b16 %v561
    %v602 = vunpack.c.l.b16 %v562
    %v603 = vpack.c.b16 %v588, %v587
    %v604 = vpack.c.b16 %v590, %v589
    %v605 = vpack.c.b16 %v592, %v591
    %v606 = vpack.c.b16 %v594, %v593
    %v607 = vpack.c.b16 %v596, %v595
    %v608 = vpack.c.b16 %v598, %v597
    %v609 = vpack.c.b16 %v600, %v599
    %v610 = vpack.c.b16 %v602, %v601
    %619 = vmatprep.subr.bf16.mxu0 0
    %620 = vmatpush1.bf16.msra.mxu0 %v610
    %621 = vmatprep.subr.bf16.mxu0 0
    %622 = vmatpush1.bf16.msra.mxu0 %v609
    %623 = vmatprep.subr.bf16.mxu0 0
    %624 = vmatpush1.bf16.msra.mxu0 %v608
    %625 = vmatprep.subr.bf16.mxu0 0
    %626 = vmatpush1.bf16.msra.mxu0 %v607
    %627 = vmatprep.subr.bf16.mxu0 0
    %628 = vmatpush1.bf16.msra.mxu0 %v606
    %629 = vmatprep.subr.bf16.mxu0 0
    %630 = vmatpush1.bf16.msra.mxu0 %v605
    %631 = vmatprep.subr.bf16.mxu0 0
    %632 = vmatpush1.bf16.msra.mxu0 %v604
    %633 = vmatprep.subr.bf16.mxu0 0
    %634 = vmatpush1.bf16.msra.mxu0 %v603
    %635 = vmatprep.subr.bf16.mxu0 0
    %636 = vmatpush2.bf16.msra.mxu0 0
    %637 = vmatprep.subr.bf16.mxu0 0
    %638 = vmatpush2.bf16.msra.mxu0 0
    %639 = vmatprep.subr.bf16.mxu0 0
    %640 = vmatpush2.bf16.msra.mxu0 0
    %641 = vmatprep.subr.bf16.mxu0 0
    %642 = vmatpush2.bf16.msra.mxu0 0
    %643 = vmatprep.subr.bf16.mxu0 0
    %644 = vmatpush2.bf16.msra.mxu0 0
    %645 = vmatprep.subr.bf16.mxu0 0
    %646 = vmatpush2.bf16.msra.mxu0 0
    %647 = vmatprep.subr.bf16.mxu0 0
    %648 = vmatpush2.bf16.msra.mxu0 0
    %649 = vmatprep.subr.bf16.mxu0 0
    %650 = vmatpush2.bf16.msra.mxu0 0
    %651 = vmatprep.mubr.bf16.mxu0 0
    %652 = vmatmul.mubr.bf16.gmra.mxu0 %v564
    %v653 = vpop.f32.mrf.mxu0
    %v654 = vadd.f32 %v569, %v653
    %v655 = vpop.f32.mrf.mxu0
    %v656 = vpop.f32.mrf.mxu0
    %v657 = vpop.f32.mrf.mxu0
    %658 = vdwg.mxu0
    %659 = vst [vmem:[#allocation13] sm:$0xff] %v654
    // Predicated region
    $region66: #{tpu_custom_call.1} parent=1 // pred_check
      _
    $region67: #{tpu_custom_call.1} parent=1 // pred_check_branch
      %661 = sbr.rel (0) target = $region69
    $region68: #{tpu_custom_call.1} parent=1 // pred_region
      %s663 = ssub.s32 128, 128
      %664 = vsyncadd [#allocation4], %s663
      %s666 = sshll.u32 [#allocation13], 4
      %s667 = int_to_ptr.vmem [resolvable:$true] %s666
      %669 = dma.vmem_to_hbm [thread:$0]  %s667, 128, %s10, [#allocation4]
    $region69: #{tpu_custom_call.1} parent=1 // pred_fallthru
      _
    // Predicated region
    $region70: #{tpu_custom_call.1} parent=1 // pred_check
      _
    $region71: #{tpu_custom_call.1} parent=1 // pred_check_branch
      %671 = sbr.rel (0) target = $region73
    $region72: #{tpu_custom_call.1} parent=1 // pred_region
      %672 = dma.done [#allocation4], 128
    $region73: #{tpu_custom_call.1} parent=1 // pred_fallthru
      _
    %673 = vsyncpa [#allocation3], 1
    %674 = vsyncpa [#allocation6], 1
    %675 = vsyncpa [#allocation9], 1
    %676 = vsyncpa [#allocation12], 1
    %677 = vsyncpa [#allocation4], 1

</llo_original>
